<compile_context>
chip_gen: v7x
topology: tpu7x:2x2x1
jax: 0.10.0
libtpu: 0.0.40
codegen_flags: <defaults>
</compile_context>

<pallas_src>
import functools

import jax
import jax.numpy as jnp
from jax.experimental import pallas as pl
from jax.experimental.pallas import tpu as pltpu


def linear_residual_kernel(x_ref, wt_ref, o_ref, *, matmul_dtype):
    # x_ref:  (tm, K) activation tile, f32
    # wt_ref: (K, N)  weight, already transposed in the wrapper (no per-step
    #                 layout fix-up inside the loop).
    # o_ref:  (tm, N)
    x = x_ref[...]
    xm = x if matmul_dtype is None else x.astype(matmul_dtype)
    # Standard contraction x @ w_t on the MXU, f32 accumulate.
    p1 = jnp.dot(xm, wt_ref[...], preferred_element_type=jnp.float32)
    o_ref[...] = (x + p1).astype(o_ref.dtype)  # x is already f32; no extra cast


def linear_residual(x, w, *, tm=2048, matmul_dtype=None):
    """Fused `x + x @ w.T`.

    x: (M, K) float32
    w: (N, K) float32, PyTorch Linear weight layout. Requires N == K so the
       residual add is well-defined.
    matmul_dtype: optional (e.g. jnp.bfloat16) to run the MXU contraction in a
       narrower dtype (f32 accumulate kept); default None = full f32.
       NOTE: bf16 needs a relaxed (~1e-2 rel) tolerance for K=128.
    """
    M, K = x.shape
    N, Kw = w.shape
    assert Kw == K, "in_features mismatch"
    assert N == K, "residual add requires out_features == in_features"

    if matmul_dtype is not None:
        w = w.astype(matmul_dtype)  # halves the (one-time) weight DMA bytes

    # Transpose once in the wrapper: (N, K) -> (K, N). 64 KiB, trivially cheap,
    # and removes any per-step RHS transpose work inside the kernel loop.
    w_t = jnp.transpose(w)

    # Tile selection:
    #  * cap at 4096 rows so double-buffered in+out blocks fit every
    #    generation's default scoped VMEM (v5e 16 MiB) with headroom,
    #  * never exceed M,
    #  * keep >= 2 grid steps for large M so "parallel" can shard across the
    #    two v7x TensorCores (keep sublane (8) alignment when splitting).
    tm = min(tm, 4096, M)
    if M > 512 and pl.cdiv(M, tm) < 2:
        tm = ((pl.cdiv(M, 2) + 7) // 8) * 8
    grid = (pl.cdiv(M, tm),)

    kernel = functools.partial(linear_residual_kernel, matmul_dtype=matmul_dtype)

    return pl.pallas_call(
        kernel,
        out_shape=jax.ShapeDtypeStruct((M, N), x.dtype),
        grid_spec=pltpu.PrefetchScalarGridSpec(
            num_scalar_prefetch=0,
            grid=grid,
            in_specs=[
                pl.BlockSpec((tm, K), lambda i: (i, 0)),  # x tile (rows of M)
                pl.BlockSpec((K, N), lambda i: (0, 0)),   # full weight, (in,out)
            ],
            out_specs=pl.BlockSpec((tm, N), lambda i: (i, 0)),
        ),
        # Output has the same shape/dtype as x and every x block is fully read
        # before its store with identical in/out index maps, so alias x's
        # buffer to the output (effective when the caller donates x).
        input_output_aliases={0: 0},
        cost_estimate=pl.CostEstimate(
            flops=2 * M * K * N,
            transcendentals=0,
            # weight counted once at its actual itemsize (constant block index).
            bytes_accessed=(M * K + M * N) * x.dtype.itemsize
            + N * K * w_t.dtype.itemsize,
        ),
        compiler_params=pltpu.CompilerParams(
            dimension_semantics=("parallel",),  # split M across TCs on v7x
        ),
    )(x, w_t)


if __name__ == "__main__":
    key = jax.random.PRNGKey(0)
    kx, kw = jax.random.split(key)

    batch, feat = 16, 128  # small, tile-aligned shapes consistent with the module
    x = jax.random.normal(kx, (batch, feat), dtype=jnp.float32)
    # Deterministic "Linear(feat, feat, bias=False)" weight, PyTorch (out, in) layout.
    w = jax.random.normal(kw, (feat, feat), dtype=jnp.float32) * (1.0 / jnp.sqrt(feat))

    # Pure-JAX reference (computed before the aliased kernel call).
    ref = x + x @ w.T

    out = jax.block_until_ready(linear_residual(x, w))

    assert out.shape == ref.shape
    assert jnp.allclose(out, ref, atol=1e-4, rtol=1e-4), "mismatch vs reference"

    print("KERNEL_OK")
</pallas_src>

<mosaic_0001>
module attributes {stable_mosaic.version = 11 : i64} {
  func.func @linear_residual_kernel(%arg0: i32, %arg1: memref<16x128xf32, #tpu.memory_space<vmem>>, %arg2: memref<128x128xf32, #tpu.memory_space<vmem>>, %arg3: memref<16x128xf32, #tpu.memory_space<vmem>>) attributes {dimension_semantics = [#tpu.dimension_semantics<parallel>], iteration_bounds = array<i64: 1>, scalar_prefetch = 0 : i64, scratch_operands = 0 : i64, tpu.core_type = #tpu.core_type<tc>, window_params = [{transform_indices = @transform_0, window_bounds = array<i64: 16, 128>}, {pipeline_mode = #tpu.pipeline_mode<synchronous>, transform_indices = @transform_1, window_bounds = array<i64: 128, 128>}, {transform_indices = @transform_2, window_bounds = array<i64: 16, 128>}]} {
    %c0 = arith.constant 0 : index
    %c0_0 = arith.constant 0 : index
    %0 = vector.load %arg1[%c0, %c0_0] : memref<16x128xf32, #tpu.memory_space<vmem>>, vector<16x128xf32>
    %c0_1 = arith.constant 0 : index
    %c0_2 = arith.constant 0 : index
    %1 = vector.load %arg2[%c0_1, %c0_2] : memref<128x128xf32, #tpu.memory_space<vmem>>, vector<128x128xf32>
    %cst = arith.constant dense<0.000000e+00> : vector<16x128xf32>
    %2 = tpu.matmul %0, %1, %cst {dimension_numbers = #tpu.dot_dimension_numbers<[1], [0], [0], [1], [0, 0, 1, 1], [], []>} : vector<16x128xf32>, vector<128x128xf32>, vector<16x128xf32> -> vector<16x128xf32>
    %3 = arith.addf %0, %2 : vector<16x128xf32>
    %c0_3 = arith.constant 0 : index
    %c0_4 = arith.constant 0 : index
    %4 = vector.load %arg3[%c0_3, %c0_4] : memref<16x128xf32, #tpu.memory_space<vmem>>, vector<16x128xf32>
    tpu.vector_store %arg3[%c0_3, %c0_4], %3 {strides = array<i32>} : memref<16x128xf32, #tpu.memory_space<vmem>>, vector<16x128xf32>,
    return
  }
  func.func @transform_0(%arg0: i32) -> (i32, i32) {
    %c0_i32 = arith.constant 0 : i32
    %c0_i32_0 = arith.constant 0 : i32
    return %arg0, %c0_i32 : i32, i32
  }
  func.func @transform_1(%arg0: i32) -> (i32, i32) {
    %c0_i32 = arith.constant 0 : i32
    %c0_i32_0 = arith.constant 0 : i32
    %c0_i32_1 = arith.constant 0 : i32
    return %c0_i32, %c0_i32_0 : i32, i32
  }
  func.func @transform_2(%arg0: i32) -> (i32, i32) {
    %c0_i32 = arith.constant 0 : i32
    %c0_i32_0 = arith.constant 0 : i32
    return %arg0, %c0_i32 : i32, i32
  }
}

</mosaic_0001>

<llo_original>
// kernel: tpu_custom_call.1
$region0: #{tpu_custom_call.1}
  #allocation0 [shape = 'u32[]', space=smem, size = 0x4, offset = 0x4, fixed_abs, tag = 'smem constant byte address 0x4 - core index']
  #allocation1 [shape = 'u32[144,128]{1,0:T(1,128)}', space=vmem, size = 0x12000, scoped, tag = 'internal scratch']
  %s0 = inlined_call_operand.hbm [shape: f32[16,128], index: 0, kind: input, shape index: {}, may-alias: {0,2}]
  %s1 = inlined_call_operand.hbm [shape: f32[128,128], index: 1, kind: input, shape index: {}]
  %s2 = inlined_call_operand.hbm [shape: f32[16,128], index: 2, kind: output, shape index: {}, may-alias: {0,2}]
  %s3 = sld [smem:[#allocation0]]
  $region26: #{tpu_custom_call.1} parent=0
    _
  %s5 = ssub.s32 1, %s3
  %s6 = scalar_select 0, %s5, %s3
  $region1: #{tpu_custom_call.1} parent=0
    #allocation2 [shape = 'u8[8192]{0}', space=vmem, size = 0x2000, scoped, tag = 'input window, operand 0, single buffered']
    #allocation3 [shape = 's32[1]{0}', space=sflag, size = 0x4, scoped, tag = 'scoped memory for tpu_custom_call.1']
    #allocation4 [shape = 's32[1]{0}', space=sflag, size = 0x4, scoped, tag = 'scoped memory for tpu_custom_call.1']
    #allocation5 [shape = 'u8[65536]{0}', space=vmem, size = 0x10000, scoped, tag = 'input window, operand 1, single buffered']
    #allocation6 [shape = 's32[1]{0}', space=sflag, size = 0x4, scoped, tag = 'scoped memory for tpu_custom_call.1']
    #allocation7 [shape = 'u8[8192]{0}', space=vmem, size = 0x2000, scoped, tag = 'output window, operand 0, single buffered']
    %7 = vsyncpa [#allocation3], 0
    %8 = vsyncpa [#allocation6], 0
    %9 = vsyncpa [#allocation4], 0
    // Predicated region
    $region2: #{tpu_custom_call.1} parent=1 // pred_check
      _
    $region3: #{tpu_custom_call.1} parent=1 // pred_check_branch
      %11 = sbr.rel (0) target = $region5
    $region4: #{tpu_custom_call.1} parent=1 // pred_region
      %s13 = ssub.s32 256, 256
      %14 = vsyncadd [#allocation3], %s13
      %s15 = sshll.u32 [#allocation2], 4
      %s16 = int_to_ptr.vmem [resolvable:$true] %s15
      %21 = dma.hbm_to_vmem [thread:$0]  %s0, 256, %s16, [#allocation3], 128, 128, 8
    $region5: #{tpu_custom_call.1} parent=1 // pred_fallthru
      _
    // Predicated region
    $region6: #{tpu_custom_call.1} parent=1 // pred_check
      _
    $region7: #{tpu_custom_call.1} parent=1 // pred_check_branch
      %23 = sbr.rel (0) target = $region9
    $region8: #{tpu_custom_call.1} parent=1 // pred_region
      %s25 = ssub.s32 2048, 2048
      %26 = vsyncadd [#allocation6], %s25
      %s27 = sshll.u32 [#allocation5], 4
      %s28 = int_to_ptr.vmem [resolvable:$true] %s27
      %33 = dma.hbm_to_vmem [thread:$0]  %s1, 2048, %s28, [#allocation6], 128, 128, 8
    $region9: #{tpu_custom_call.1} parent=1 // pred_fallthru
      _
    // Predicated region
    $region10: #{tpu_custom_call.1} parent=1 // pred_check
      _
    $region11: #{tpu_custom_call.1} parent=1 // pred_check_branch
      %35 = sbr.rel (0) target = $region13
    $region12: #{tpu_custom_call.1} parent=1 // pred_region
      %36 = dma.done [#allocation3], 256
    $region13: #{tpu_custom_call.1} parent=1 // pred_fallthru
      _
    // Predicated region
    $region14: #{tpu_custom_call.1} parent=1 // pred_check
      _
    $region15: #{tpu_custom_call.1} parent=1 // pred_check_branch
      %38 = sbr.rel (0) target = $region17
    $region16: #{tpu_custom_call.1} parent=1 // pred_region
      %39 = dma.done [#allocation6], 2048
    $region17: #{tpu_custom_call.1} parent=1 // pred_fallthru
      _
    %v40 = vld [vmem:[#allocation2] sm:$0xff]
    %v41 = vld [vmem:[#allocation2 + $0x8] sm:$0xff]
    %v42 = vld [vmem:[#allocation5] sm:$0xff]
    %v43 = vld [vmem:[#allocation5 + $0x8] sm:$0xff]
    %v44 = vld [vmem:[#allocation5 + $0x10] sm:$0xff]
    %v45 = vld [vmem:[#allocation5 + $0x18] sm:$0xff]
    %v46 = vld [vmem:[#allocation5 + $0x20] sm:$0xff]
    %v47 = vld [vmem:[#allocation5 + $0x28] sm:$0xff]
    %v48 = vld [vmem:[#allocation5 + $0x30] sm:$0xff]
    %v49 = vld [vmem:[#allocation5 + $0x38] sm:$0xff]
    %v50 = vld [vmem:[#allocation5 + $0x40] sm:$0xff]
    %v51 = vld [vmem:[#allocation5 + $0x48] sm:$0xff]
    %v52 = vld [vmem:[#allocation5 + $0x50] sm:$0xff]
    %v53 = vld [vmem:[#allocation5 + $0x58] sm:$0xff]
    %v54 = vld [vmem:[#allocation5 + $0x60] sm:$0xff]
    %v55 = vld [vmem:[#allocation5 + $0x68] sm:$0xff]
    %v56 = vld [vmem:[#allocation5 + $0x70] sm:$0xff]
    %v57 = vld [vmem:[#allocation5 + $0x78] sm:$0xff]
    %58 = vmatprep.subr.mxu0 0.0
    %59 = vmatpush1.msra.mxu0 %v42
    %60 = vmatprep.subr.mxu0 0.0
    %61 = vmatpush1.msra.mxu0 %v43
    %62 = vmatprep.subr.mxu0 0.0
    %63 = vmatpush1.msra.mxu0 %v44
    %64 = vmatprep.subr.mxu0 0.0
    %65 = vmatpush1.msra.mxu0 %v45
    %66 = vmatprep.subr.mxu0 0.0
    %67 = vmatpush1.msra.mxu0 %v46
    %68 = vmatprep.subr.mxu0 0.0
    %69 = vmatpush1.msra.mxu0 %v47
    %70 = vmatprep.subr.mxu0 0.0
    %71 = vmatpush1.msra.mxu0 %v48
    %72 = vmatprep.subr.mxu0 0.0
    %73 = vmatpush1.msra.mxu0 %v49
    %74 = vmatprep.subr.mxu0 0.0
    %75 = vmatpush1.msra.mxu0 %v50
    %76 = vmatprep.subr.mxu0 0.0
    %77 = vmatpush1.msra.mxu0 %v51
    %78 = vmatprep.subr.mxu0 0.0
    %79 = vmatpush1.msra.mxu0 %v52
    %80 = vmatprep.subr.mxu0 0.0
    %81 = vmatpush1.msra.mxu0 %v53
    %82 = vmatprep.subr.mxu0 0.0
    %83 = vmatpush1.msra.mxu0 %v54
    %84 = vmatprep.subr.mxu0 0.0
    %85 = vmatpush1.msra.mxu0 %v55
    %86 = vmatprep.subr.mxu0 0.0
    %87 = vmatpush1.msra.mxu0 %v56
    %88 = vmatprep.subr.mxu0 0.0
    %89 = vmatpush1.msra.mxu0 %v57
    %90 = vmatprep.subr.mxu0 0.0
    %91 = vmatpush1.msra.mxu0 0.0
    %92 = vmatprep.subr.mxu0 0.0
    %93 = vmatpush1.msra.mxu0 0.0
    %94 = vmatprep.subr.mxu0 0.0
    %95 = vmatpush1.msra.mxu0 0.0
    %96 = vmatprep.subr.mxu0 0.0
    %97 = vmatpush1.msra.mxu0 0.0
    %98 = vmatprep.subr.mxu0 0.0
    %99 = vmatpush1.msra.mxu0 0.0
    %100 = vmatprep.subr.mxu0 0.0
    %101 = vmatpush1.msra.mxu0 0.0
    %102 = vmatprep.subr.mxu0 0.0
    %103 = vmatpush1.msra.mxu0 0.0
    %104 = vmatprep.subr.mxu0 0.0
    %105 = vmatpush1.msra.mxu0 0.0
    %106 = vmatprep.subr.mxu0 0.0
    %107 = vmatpush1.msra.mxu0 0.0
    %108 = vmatprep.subr.mxu0 0.0
    %109 = vmatpush1.msra.mxu0 0.0
    %110 = vmatprep.subr.mxu0 0.0
    %111 = vmatpush1.msra.mxu0 0.0
    %112 = vmatprep.subr.mxu0 0.0
    %113 = vmatpush1.msra.mxu0 0.0
    %114 = vmatprep.subr.mxu0 0.0
    %115 = vmatpush1.msra.mxu0 0.0
    %116 = vmatprep.subr.mxu0 0.0
    %117 = vmatpush1.msra.mxu0 0.0
    %118 = vmatprep.subr.mxu0 0.0
    %119 = vmatpush1.msra.mxu0 0.0
    %120 = vmatprep.subr.mxu0 0.0
    %121 = vmatpush1.msra.mxu0 0.0
    %122 = vmatprep.mubr.f32.mxu0 0.0
    %123 = vmatmul.mubr.f32.gmra.mrb[0].mxu0 %v40
    %v124 = vpop.f32.mrb[0].mxu0
    %v125 = vadd.f32 0.0, %v124
    %v126 = vpop.f32.mrb[0].mxu0
    %127 = vmatprep.mubr.f32.mxu0 0.0
    %128 = vmatmul.mubr.f32.gmra.mrb[0].mxu0 %v41
    %v129 = vpop.f32.mrb[0].mxu0
    %v130 = vadd.f32 0.0, %v129
    %v131 = vpop.f32.mrb[0].mxu0
    %132 = vdwg.mxu0
    %v133 = vadd.f32 %v40, %v125
    %v134 = vadd.f32 %v41, %v130
    %135 = vst [vmem:[#allocation7] sm:$0xff] %v133
    %136 = vst [vmem:[#allocation7 + $0x8] sm:$0xff] %v134
    // Predicated region
    $region18: #{tpu_custom_call.1} parent=1 // pred_check
      _
    $region19: #{tpu_custom_call.1} parent=1 // pred_check_branch
      %138 = sbr.rel (0) target = $region21
    $region20: #{tpu_custom_call.1} parent=1 // pred_region
      %s140 = ssub.s32 256, 256
      %141 = vsyncadd [#allocation4], %s140
      %s142 = sshll.u32 [#allocation7], 4
      %s143 = int_to_ptr.vmem [resolvable:$true] %s142
      %148 = dma.vmem_to_hbm [thread:$0]  %s143, 256, %s2, [#allocation4], 128, 128, 8
    $region21: #{tpu_custom_call.1} parent=1 // pred_fallthru
      _
    // Predicated region
    $region22: #{tpu_custom_call.1} parent=1 // pred_check
      _
    $region23: #{tpu_custom_call.1} parent=1 // pred_check_branch
      %150 = sbr.rel (0) target = $region25
    $region24: #{tpu_custom_call.1} parent=1 // pred_region
      %151 = dma.done [#allocation4], 256
    $region25: #{tpu_custom_call.1} parent=1 // pred_fallthru
      _
    %152 = vsyncpa [#allocation3], 1
    %153 = vsyncpa [#allocation6], 1
    %154 = vsyncpa [#allocation4], 1

</llo_original>
